<compile_context>
chip_gen: v6e
topology: v6e:2x2x1
jax: 0.10.0
libtpu: 0.0.40
codegen_flags: <defaults>
</compile_context>

<pallas_src>
import functools

import jax
import jax.numpy as jnp
from jax import lax
from jax.experimental import pallas as pl
from jax.experimental.pallas import tpu as pltpu


D_IN, D_HID, D_OUT = 2, 64, 2


def _round_up(n, m):
    return ((n + m - 1) // m) * m


def _scorenet_kernel(x_ref, w1_ref, b1_ref, w2_ref, b2_ref, w3_ref, b3_ref,
                     o_ref, *, chunk):
    # Feature-major: x_ref (D_IN, bn) f32, o_ref (D_OUT, bn) f32.
    # Weights are bf16 in PyTorch (out, in) layout; biases f32 as (out, 1) columns.
    w1 = w1_ref[...]                                    # (64, 2)  bf16
    w2 = w2_ref[...]                                    # (64, 64) bf16
    w3 = w3_ref[...]                                    # (2, 64)  bf16

    # Hoist bias lane-broadcasts out of the chunk loop (broadcast_in_dim is not CSE'd).
    b1 = jnp.broadcast_to(b1_ref[...], (D_HID, chunk))  # f32
    b2 = jnp.broadcast_to(b2_ref[...], (D_HID, chunk))
    b3 = jnp.broadcast_to(b3_ref[...], (D_OUT, chunk))

    n_chunks = x_ref.shape[1] // chunk                  # static

    def body(c, carry):
        j = pl.multiple_of(c * chunk, chunk)
        # bf16 MXU operands, f32 accumulate; bias + ReLU stay f32.
        xc = x_ref[:, pl.ds(j, chunk)].astype(jnp.bfloat16)               # (2, chunk)
        h1 = jnp.dot(w1, xc, preferred_element_type=jnp.float32)          # (64, chunk)
        h1 = jnp.maximum(h1 + b1, 0.0)
        h2 = jnp.dot(w2, h1.astype(jnp.bfloat16),
                     preferred_element_type=jnp.float32)                  # (64, chunk)
        h2 = jnp.maximum(h2 + b2, 0.0)
        out = jnp.dot(w3, h2.astype(jnp.bfloat16),
                      preferred_element_type=jnp.float32)                 # (2, chunk)
        o_ref[:, pl.ds(j, chunk)] = (out + b3).astype(o_ref.dtype)
        return carry

    lax.fori_loop(0, n_chunks, body, 0, unroll=True)


@functools.partial(jax.jit, static_argnames=("block_n",))
def scorenet_forward_fm(xT, params, *, block_n=8192):
    """Feature-major forward. xT: (2, N) f32 -> (2, N) f32.

    params: (w1, b1, w2, b2, w3, b3), weights in (out_features, in_features)
    layout (PyTorch native), biases shaped (out_features, 1).
    No transposes; padding only when N is not a multiple of the batch tile.
    """
    w1, b1, w2, b2, w3, b3 = params
    n = xT.shape[1]

    block_n = _round_up(block_n, 128)
    bn = min(block_n, _round_up(n, 128))                 # lane-dense tile
    chunk = next(c for c in (512, 256, 128) if bn % c == 0)
    n_pad = _round_up(n, bn)

    if n_pad != n:
        # Only for ragged N (one extra HBM pass); tile-multiple N skips this.
        xT = jnp.pad(xT, ((0, 0), (0, n_pad - n)))

    # Weights are tiny; cast to bf16 once here (MXU fast path, f32 accumulate).
    w1b, w2b, w3b = (w.astype(jnp.bfloat16) for w in (w1, w2, w3))

    grid = (n_pad // bn,)
    full = lambda shape: pl.BlockSpec(shape, lambda i: (0, 0))   # grid-invariant

    outT = pl.pallas_call(
        functools.partial(_scorenet_kernel, chunk=chunk),
        out_shape=jax.ShapeDtypeStruct((D_OUT, n_pad), jnp.float32),
        grid_spec=pltpu.PrefetchScalarGridSpec(
            num_scalar_prefetch=0,
            grid=grid,
            in_specs=[
                pl.BlockSpec((D_IN, bn), lambda i: (0, i)),      # x tile (lane-dense)
                full((D_HID, D_IN)),                             # w1 (64, 2)  bf16
                full((D_HID, 1)),                                # b1 f32
                full((D_HID, D_HID)),                            # w2 (64, 64) bf16
                full((D_HID, 1)),                                # b2 f32
                full((D_OUT, D_HID)),                            # w3 (2, 64)  bf16
                full((D_OUT, 1)),                                # b3 f32
            ],
            out_specs=pl.BlockSpec((D_OUT, bn), lambda i: (0, i)),
        ),
        compiler_params=pltpu.CompilerParams(
            dimension_semantics=("parallel",),        # megacore-shardable on v7x
            vmem_limit_bytes=32 * 1024 * 1024,        # explicit budget (v5e default is 16 MiB)
        ),
    )(xT, w1b, b1, w2b, b2, w3b, b3)

    if n_pad != n:
        outT = outT[:, :n]
    return outT


@functools.partial(jax.jit, static_argnames=("block_n",))
def scorenet_forward(x, params, *, block_n=8192):
    """PyTorch-layout forward: x (N, 2) -> (N, 2).

    Thin layout shim over the feature-major kernel; the transposes here are
    wrapper-side plumbing for row-major callers only.
    """
    return scorenet_forward_fm(x.T, params, block_n=block_n).T


def init_params(key):
    """Deterministic init mimicking PyTorch's default Linear init:
    U(-1/sqrt(fan_in), 1/sqrt(fan_in)). Weights are (out, in); biases (out, 1)."""
    ks = jax.random.split(key, 6)

    def linear(kw, kb, fan_in, fan_out):
        bound = 1.0 / jnp.sqrt(fan_in)
        w = jax.random.uniform(kw, (fan_out, fan_in), jnp.float32, -bound, bound)
        b = jax.random.uniform(kb, (fan_out, 1), jnp.float32, -bound, bound)
        return w, b

    w1, b1 = linear(ks[0], ks[1], D_IN, D_HID)
    w2, b2 = linear(ks[2], ks[3], D_HID, D_HID)
    w3, b3 = linear(ks[4], ks[5], D_HID, D_OUT)
    return (w1, b1, w2, b2, w3, b3)


def scorenet_reference(x, params):
    """Pure-JAX f32 reference, row-major (N, 2) -> (N, 2)."""
    w1, b1, w2, b2, w3, b3 = params
    h1 = jnp.maximum(x @ w1.T + b1.T, 0.0)
    h2 = jnp.maximum(h1 @ w2.T + b2.T, 0.0)
    return h2 @ w3.T + b3.T


if __name__ == "__main__":
    key = jax.random.PRNGKey(0)
    k_param, k_x1, k_x2 = jax.random.split(key, 3)

    params = init_params(k_param)

    # bf16 MXU operands (f32 accumulate) -> loosened tolerance vs f32 reference.
    ATOL = RTOL = 3e-2

    # Feature-major fast path (no wrapper transpose / pad): N is a multiple of 128.
    xT = jax.random.normal(k_x1, (D_IN, 256), jnp.float32)
    outT = jax.block_until_ready(scorenet_forward_fm(xT, params))
    refT = scorenet_reference(xT.T, params).T
    assert outT.shape == (D_OUT, 256)
    assert jnp.allclose(outT, refT, atol=ATOL, rtol=RTOL), \
        float(jnp.max(jnp.abs(outT - refT)))

    # PyTorch-layout compatibility path with a ragged batch (pad + tail slice).
    x_odd = jax.random.normal(k_x2, (37, D_IN), jnp.float32)
    out_odd = jax.block_until_ready(scorenet_forward(x_odd, params))
    ref_odd = scorenet_reference(x_odd, params)
    assert out_odd.shape == (37, D_OUT)
    assert jnp.allclose(out_odd, ref_odd, atol=ATOL, rtol=RTOL), \
        float(jnp.max(jnp.abs(out_odd - ref_odd)))

    print("KERNEL_OK")
</pallas_src>

<mosaic_0001>
module attributes {stable_mosaic.version = 11 : i64} {
  func.func @_scorenet_kernel(%arg0: i32, %arg1: memref<2x256xf32, #tpu.memory_space<vmem>>, %arg2: memref<64x2xbf16, #tpu.memory_space<vmem>>, %arg3: memref<64x1xf32, #tpu.memory_space<vmem>>, %arg4: memref<64x64xbf16, #tpu.memory_space<vmem>>, %arg5: memref<64x1xf32, #tpu.memory_space<vmem>>, %arg6: memref<2x64xbf16, #tpu.memory_space<vmem>>, %arg7: memref<2x1xf32, #tpu.memory_space<vmem>>, %arg8: memref<2x256xf32, #tpu.memory_space<vmem>>) attributes {dimension_semantics = [#tpu.dimension_semantics<parallel>], iteration_bounds = array<i64: 1>, scalar_prefetch = 0 : i64, scratch_operands = 0 : i64, tpu.core_type = #tpu.core_type<tc>, window_params = [{transform_indices = @transform_0, window_bounds = array<i64: 2, 256>}, {pipeline_mode = #tpu.pipeline_mode<synchronous>, transform_indices = @transform_1, window_bounds = array<i64: 64, 2>}, {pipeline_mode = #tpu.pipeline_mode<synchronous>, transform_indices = @transform_2, window_bounds = array<i64: 64, 1>}, {pipeline_mode = #tpu.pipeline_mode<synchronous>, transform_indices = @transform_3, window_bounds = array<i64: 64, 64>}, {pipeline_mode = #tpu.pipeline_mode<synchronous>, transform_indices = @transform_4, window_bounds = array<i64: 64, 1>}, {pipeline_mode = #tpu.pipeline_mode<synchronous>, transform_indices = @transform_5, window_bounds = array<i64: 2, 64>}, {pipeline_mode = #tpu.pipeline_mode<synchronous>, transform_indices = @transform_6, window_bounds = array<i64: 2, 1>}, {transform_indices = @transform_7, window_bounds = array<i64: 2, 256>}]} {
    %c0 = arith.constant 0 : index
    %c0_0 = arith.constant 0 : index
    %0 = vector.load %arg2[%c0, %c0_0] : memref<64x2xbf16, #tpu.memory_space<vmem>>, vector<64x2xbf16>
    %c0_1 = arith.constant 0 : index
    %c0_2 = arith.constant 0 : index
    %1 = vector.load %arg4[%c0_1, %c0_2] : memref<64x64xbf16, #tpu.memory_space<vmem>>, vector<64x64xbf16>
    %c0_3 = arith.constant 0 : index
    %c0_4 = arith.constant 0 : index
    %2 = vector.load %arg6[%c0_3, %c0_4] : memref<2x64xbf16, #tpu.memory_space<vmem>>, vector<2x64xbf16>
    %c0_5 = arith.constant 0 : index
    %c0_6 = arith.constant 0 : index
    %3 = vector.load %arg3[%c0_5, %c0_6] : memref<64x1xf32, #tpu.memory_space<vmem>>, vector<64x1xf32>
    %4 = vector.shape_cast %3 : vector<64x1xf32> to vector<64x1xf32>
    %5 = vector.broadcast %4 : vector<64x1xf32> to vector<64x256xf32>
    %c0_7 = arith.constant 0 : index
    %c0_8 = arith.constant 0 : index
    %6 = vector.load %arg5[%c0_7, %c0_8] : memref<64x1xf32, #tpu.memory_space<vmem>>, vector<64x1xf32>
    %7 = vector.shape_cast %6 : vector<64x1xf32> to vector<64x1xf32>
    %8 = vector.broadcast %7 : vector<64x1xf32> to vector<64x256xf32>
    %c0_9 = arith.constant 0 : index
    %c0_10 = arith.constant 0 : index
    %9 = vector.load %arg7[%c0_9, %c0_10] : memref<2x1xf32, #tpu.memory_space<vmem>>, vector<2x1xf32>
    %10 = vector.shape_cast %9 : vector<2x1xf32> to vector<2x1xf32>
    %11 = vector.broadcast %10 : vector<2x1xf32> to vector<2x256xf32>
    %c0_i32 = arith.constant 0 : i32
    %c256_i32 = arith.constant 256 : i32
    %12 = arith.muli %c0_i32, %c256_i32 : i32
    %13 = tpu.assume_multiple %12, 256 : i32
    %c0_11 = arith.constant 0 : index
    %14 = arith.index_cast %13 : i32 to index
    %15 = vector.load %arg1[%c0_11, %14] : memref<2x256xf32, #tpu.memory_space<vmem>>, vector<2x256xf32>
    %16 = arith.truncf %15 : vector<2x256xf32> to vector<2x256xbf16>
    %cst = arith.constant dense<0.000000e+00> : vector<64x256xf32>
    %17 = tpu.matmul %0, %16, %cst {dimension_numbers = #tpu.dot_dimension_numbers<[1], [0], [0], [1], [0, 0, 1, 1], [], []>} : vector<64x2xbf16>, vector<2x256xbf16>, vector<64x256xf32> -> vector<64x256xf32>
    %18 = arith.addf %17, %5 : vector<64x256xf32>
    %cst_12 = arith.constant 0.000000e+00 : f32
    %19 = vector.broadcast %cst_12 : f32 to vector<64x256xf32>
    %20 = arith.maximumf %18, %19 : vector<64x256xf32>
    %21 = arith.truncf %20 : vector<64x256xf32> to vector<64x256xbf16>
    %cst_13 = arith.constant dense<0.000000e+00> : vector<64x256xf32>
    %22 = tpu.matmul %1, %21, %cst_13 {dimension_numbers = #tpu.dot_dimension_numbers<[1], [0], [0], [1], [0, 0, 1, 1], [], []>} : vector<64x64xbf16>, vector<64x256xbf16>, vector<64x256xf32> -> vector<64x256xf32>
    %23 = arith.addf %22, %8 : vector<64x256xf32>
    %cst_14 = arith.constant 0.000000e+00 : f32
    %24 = vector.broadcast %cst_14 : f32 to vector<64x256xf32>
    %25 = arith.maximumf %23, %24 : vector<64x256xf32>
    %26 = arith.truncf %25 : vector<64x256xf32> to vector<64x256xbf16>
    %cst_15 = arith.constant dense<0.000000e+00> : vector<2x256xf32>
    %27 = tpu.matmul %2, %26, %cst_15 {dimension_numbers = #tpu.dot_dimension_numbers<[1], [0], [0], [1], [0, 0, 1, 1], [], []>} : vector<2x64xbf16>, vector<64x256xbf16>, vector<2x256xf32> -> vector<2x256xf32>
    %28 = arith.addf %27, %11 : vector<2x256xf32>
    %c0_16 = arith.constant 0 : index
    %29 = arith.index_cast %13 : i32 to index
    %30 = vector.load %arg8[%c0_16, %29] : memref<2x256xf32, #tpu.memory_space<vmem>>, vector<2x256xf32>
    tpu.vector_store %arg8[%c0_16, %29], %28 {strides = array<i32>} : memref<2x256xf32, #tpu.memory_space<vmem>>, vector<2x256xf32>,
    %c1_i32 = arith.constant 1 : i32
    return
  }
  func.func @transform_0(%arg0: i32) -> (i32, i32) {
    %c0_i32 = arith.constant 0 : i32
    %c0_i32_0 = arith.constant 0 : i32
    return %c0_i32, %arg0 : i32, i32
  }
  func.func @transform_1(%arg0: i32) -> (i32, i32) {
    %c0_i32 = arith.constant 0 : i32
    %c0_i32_0 = arith.constant 0 : i32
    %c0_i32_1 = arith.constant 0 : i32
    return %c0_i32, %c0_i32_0 : i32, i32
  }
  func.func @transform_2(%arg0: i32) -> (i32, i32) {
    %c0_i32 = arith.constant 0 : i32
    %c0_i32_0 = arith.constant 0 : i32
    %c0_i32_1 = arith.constant 0 : i32
    return %c0_i32, %c0_i32_0 : i32, i32
  }
  func.func @transform_3(%arg0: i32) -> (i32, i32) {
    %c0_i32 = arith.constant 0 : i32
    %c0_i32_0 = arith.constant 0 : i32
    %c0_i32_1 = arith.constant 0 : i32
    return %c0_i32, %c0_i32_0 : i32, i32
  }
  func.func @transform_4(%arg0: i32) -> (i32, i32) {
    %c0_i32 = arith.constant 0 : i32
    %c0_i32_0 = arith.constant 0 : i32
    %c0_i32_1 = arith.constant 0 : i32
    return %c0_i32, %c0_i32_0 : i32, i32
  }
  func.func @transform_5(%arg0: i32) -> (i32, i32) {
    %c0_i32 = arith.constant 0 : i32
    %c0_i32_0 = arith.constant 0 : i32
    %c0_i32_1 = arith.constant 0 : i32
    return %c0_i32, %c0_i32_0 : i32, i32
  }
  func.func @transform_6(%arg0: i32) -> (i32, i32) {
    %c0_i32 = arith.constant 0 : i32
    %c0_i32_0 = arith.constant 0 : i32
    %c0_i32_1 = arith.constant 0 : i32
    return %c0_i32, %c0_i32_0 : i32, i32
  }
  func.func @transform_7(%arg0: i32) -> (i32, i32) {
    %c0_i32 = arith.constant 0 : i32
    %c0_i32_0 = arith.constant 0 : i32
    return %c0_i32, %arg0 : i32, i32
  }
}

</mosaic_0001>

<llo_original>
// kernel: scorenet_forward_fm.1
$region0: #{scorenet_forward_fm.1}
  #allocation0 [shape = 'u32[]', space=smem, size = 0x4, offset = 0x4, fixed_abs, tag = 'smem constant byte address 0x4 - core index']
  #allocation1 [shape = 'u32[144,128]{1,0:T(1,128)}', space=vmem, size = 0x12000, scoped, tag = 'internal scratch']
  %s0 = inlined_call_operand.vmem [shape: f32[2,256], index: 0, kind: input, shape index: {}]
  %s1 = inlined_call_operand.vmem [shape: bf16[64,2], index: 1, kind: input, shape index: {}]
  %s2 = inlined_call_operand.vmem [shape: f32[64,1], index: 2, kind: input, shape index: {}]
  %s3 = inlined_call_operand.vmem [shape: bf16[64,64], index: 3, kind: input, shape index: {}]
  %s4 = inlined_call_operand.vmem [shape: f32[64,1], index: 4, kind: input, shape index: {}]
  %s5 = inlined_call_operand.vmem [shape: bf16[2,64], index: 5, kind: input, shape index: {}]
  %s6 = inlined_call_operand.vmem [shape: f32[2,1], index: 6, kind: input, shape index: {}]
  %s7 = inlined_call_operand.hbm [shape: f32[2,256], index: 7, kind: output, shape index: {}]
  %s8 = sld [smem:[#allocation0]]
  $region38: #{scorenet_forward_fm.1} parent=0
    _
  %s10 = ssub.s32 1, %s8
  %s11 = scalar_select 0, %s10, %s8
  $region1: #{scorenet_forward_fm.1} parent=0
    #allocation2 [shape = 'u8[2048]{0}', space=vmem, size = 0x800, scoped, tag = 'output window, operand 0, single buffered']
    #allocation3 [shape = 's32[1]{0}', space=sflag, size = 0x4, scoped, tag = 'scoped memory for scorenet_forward_fm.1']
    %12 = vsyncpa [#allocation3], 0
    // Predicated region
    $region2: #{scorenet_forward_fm.1} parent=1 // pred_check
      _
    $region3: #{scorenet_forward_fm.1} parent=1 // pred_check_branch
      %14 = sbr.rel (0) target = $region5
    $region4: #{scorenet_forward_fm.1} parent=1 // pred_region
      _
    $region5: #{scorenet_forward_fm.1} parent=1 // pred_fallthru
      _
    // Predicated region
    $region6: #{scorenet_forward_fm.1} parent=1 // pred_check
      _
    $region7: #{scorenet_forward_fm.1} parent=1 // pred_check_branch
      %16 = sbr.rel (0) target = $region9
    $region8: #{scorenet_forward_fm.1} parent=1 // pred_region
      _
    $region9: #{scorenet_forward_fm.1} parent=1 // pred_fallthru
      _
    // Predicated region
    $region10: #{scorenet_forward_fm.1} parent=1 // pred_check
      _
    $region11: #{scorenet_forward_fm.1} parent=1 // pred_check_branch
      %18 = sbr.rel (0) target = $region13
    $region12: #{scorenet_forward_fm.1} parent=1 // pred_region
      _
    $region13: #{scorenet_forward_fm.1} parent=1 // pred_fallthru
      _
    // Predicated region
    $region14: #{scorenet_forward_fm.1} parent=1 // pred_check
      _
    $region15: #{scorenet_forward_fm.1} parent=1 // pred_check_branch
      %20 = sbr.rel (0) target = $region17
    $region16: #{scorenet_forward_fm.1} parent=1 // pred_region
      _
    $region17: #{scorenet_forward_fm.1} parent=1 // pred_fallthru
      _
    // Predicated region
    $region18: #{scorenet_forward_fm.1} parent=1 // pred_check
      _
    $region19: #{scorenet_forward_fm.1} parent=1 // pred_check_branch
      %22 = sbr.rel (0) target = $region21
    $region20: #{scorenet_forward_fm.1} parent=1 // pred_region
      _
    $region21: #{scorenet_forward_fm.1} parent=1 // pred_fallthru
      _
    // Predicated region
    $region22: #{scorenet_forward_fm.1} parent=1 // pred_check
      _
    $region23: #{scorenet_forward_fm.1} parent=1 // pred_check_branch
      %24 = sbr.rel (0) target = $region25
    $region24: #{scorenet_forward_fm.1} parent=1 // pred_region
      _
    $region25: #{scorenet_forward_fm.1} parent=1 // pred_fallthru
      _
    // Predicated region
    $region26: #{scorenet_forward_fm.1} parent=1 // pred_check
      _
    $region27: #{scorenet_forward_fm.1} parent=1 // pred_check_branch
      %26 = sbr.rel (0) target = $region29
    $region28: #{scorenet_forward_fm.1} parent=1 // pred_region
      _
    $region29: #{scorenet_forward_fm.1} parent=1 // pred_fallthru
      _
    %v28 = vld [vmem:[%s1] sm:$0xf]
    %v29 = vld [vmem:[%s1 + $0x4] sm:$0xf]
    %v30 = vld [vmem:[%s1 + $0x8] sm:$0xf]
    %v31 = vld [vmem:[%s1 + $0xc] sm:$0xf]
    %v32 = vld [vmem:[%s1 + $0x10] sm:$0xf]
    %v33 = vld [vmem:[%s1 + $0x14] sm:$0xf]
    %v34 = vld [vmem:[%s1 + $0x18] sm:$0xf]
    %v35 = vld [vmem:[%s1 + $0x1c] sm:$0xf]
    %v36 = vld [vmem:[%s3] sm:$0xf]
    %v37 = vld [vmem:[%s3 + $0x4] sm:$0xf]
    %v38 = vld [vmem:[%s3 + $0x8] sm:$0xf]
    %v39 = vld [vmem:[%s3 + $0xc] sm:$0xf]
    %v40 = vld [vmem:[%s3 + $0x10] sm:$0xf]
    %v41 = vld [vmem:[%s3 + $0x14] sm:$0xf]
    %v42 = vld [vmem:[%s3 + $0x18] sm:$0xf]
    %v43 = vld [vmem:[%s3 + $0x1c] sm:$0xf]
    %v44 = vld [vmem:[%s5] sm:$0x1]
    %v45 = vld [vmem:[%s2] sm:$0xff]
    %v46 = vld [vmem:[%s2 + $0x8] sm:$0xff]
    %v47 = vld [vmem:[%s2 + $0x10] sm:$0xff]
    %v48 = vld [vmem:[%s2 + $0x18] sm:$0xff]
    %v49 = vld [vmem:[%s2 + $0x20] sm:$0xff]
    %v50 = vld [vmem:[%s2 + $0x28] sm:$0xff]
    %v51 = vld [vmem:[%s2 + $0x30] sm:$0xff]
    %v52 = vld [vmem:[%s2 + $0x38] sm:$0xff]
    %54 = vset.pattern.permute.xlu0 0
    %55 = vperm.xlu0 %54, %v45
    %v56 = vpop.permute.xlu0 %55
    %59 = vset.pattern.permute.xlu0 0
    %60 = vperm.xlu0 %59, %v46
    %v61 = vpop.permute.xlu0 %60
    %64 = vset.pattern.permute.xlu0 0
    %65 = vperm.xlu0 %64, %v47
    %v66 = vpop.permute.xlu0 %65
    %69 = vset.pattern.permute.xlu0 0
    %70 = vperm.xlu0 %69, %v48
    %v71 = vpop.permute.xlu0 %70
    %74 = vset.pattern.permute.xlu0 0
    %75 = vperm.xlu0 %74, %v49
    %v76 = vpop.permute.xlu0 %75
    %79 = vset.pattern.permute.xlu0 0
    %80 = vperm.xlu0 %79, %v50
    %v81 = vpop.permute.xlu0 %80
    %84 = vset.pattern.permute.xlu0 0
    %85 = vperm.xlu0 %84, %v51
    %v86 = vpop.permute.xlu0 %85
    %89 = vset.pattern.permute.xlu0 0
    %90 = vperm.xlu0 %89, %v52
    %v91 = vpop.permute.xlu0 %90
    %v93 = vld [vmem:[%s4] sm:$0xff]
    %v94 = vld [vmem:[%s4 + $0x8] sm:$0xff]
    %v95 = vld [vmem:[%s4 + $0x10] sm:$0xff]
    %v96 = vld [vmem:[%s4 + $0x18] sm:$0xff]
    %v97 = vld [vmem:[%s4 + $0x20] sm:$0xff]
    %v98 = vld [vmem:[%s4 + $0x28] sm:$0xff]
    %v99 = vld [vmem:[%s4 + $0x30] sm:$0xff]
    %v100 = vld [vmem:[%s4 + $0x38] sm:$0xff]
    %102 = vset.pattern.permute.xlu0 0
    %103 = vperm.xlu0 %102, %v93
    %v104 = vpop.permute.xlu0 %103
    %107 = vset.pattern.permute.xlu0 0
    %108 = vperm.xlu0 %107, %v94
    %v109 = vpop.permute.xlu0 %108
    %112 = vset.pattern.permute.xlu0 0
    %113 = vperm.xlu0 %112, %v95
    %v114 = vpop.permute.xlu0 %113
    %117 = vset.pattern.permute.xlu0 0
    %118 = vperm.xlu0 %117, %v96
    %v119 = vpop.permute.xlu0 %118
    %122 = vset.pattern.permute.xlu0 0
    %123 = vperm.xlu0 %122, %v97
    %v124 = vpop.permute.xlu0 %123
    %127 = vset.pattern.permute.xlu0 0
    %128 = vperm.xlu0 %127, %v98
    %v129 = vpop.permute.xlu0 %128
    %132 = vset.pattern.permute.xlu0 0
    %133 = vperm.xlu0 %132, %v99
    %v134 = vpop.permute.xlu0 %133
    %137 = vset.pattern.permute.xlu0 0
    %138 = vperm.xlu0 %137, %v100
    %v139 = vpop.permute.xlu0 %138
    %v141 = vld [vmem:[%s6] sm:$0x3]
    %143 = vset.pattern.permute.xlu0 0
    %144 = vperm.xlu0 %143, %v141
    %v145 = vpop.permute.xlu0 %144
    %v147 = vld [vmem:[%s0] sm:$0xf]
    %v150 = vunpack.c.l.s4 1983009808
    %v151 = vunpack.c.0.s8 %v150
    %v152 = vlaneseq
    %v153 = vshrl.u32 %v152, 7
    %v154 = vsub.s32 %v151, %v153
    %v155 = vrot.slane %v147, %v154
    %v156 = vcombine.high %v155, %v155
    %v159 = vpack.c.bf16 %v155, %v155
    %v160 = vpack.c.bf16 %v156, %v156
    %v169 = vunpack.c.l.b16 %v28
    %v170 = vunpack.c.l.b16 %v29
    %v171 = vunpack.c.l.b16 %v30
    %v172 = vunpack.c.l.b16 %v31
    %v173 = vunpack.c.l.b16 %v32
    %v174 = vunpack.c.l.b16 %v33
    %v175 = vunpack.c.l.b16 %v34
    %v176 = vunpack.c.l.b16 %v35
    %v177 = vpack.c.b16 %v170, %v169
    %v178 = vpack.c.b16 %v172, %v171
    %v179 = vpack.c.b16 %v174, %v173
    %v180 = vpack.c.b16 %v176, %v175
    %vm181 = vcmask 15360
    %v183 = vsel %vm181, %v177, 0
    %v186 = vsel %vm181, %v178, 0
    %v189 = vsel %vm181, %v179, 0
    %v192 = vsel %vm181, %v180, 0
    %vm194 = vcmask 1040384
    %v196 = vsel %vm194, %v159, 0
    %v199 = vsel %vm194, %v160, 0
    %201 = vmatprep.subr.bf16.mxu0 0
    %202 = vmatpush1.bf16.msra.mxu0 0
    %203 = vmatprep.subr.bf16.mxu0 0
    %204 = vmatpush1.bf16.msra.mxu0 0
    %205 = vmatprep.subr.bf16.mxu0 0
    %206 = vmatpush1.bf16.msra.mxu0 0
    %207 = vmatprep.subr.bf16.mxu0 0
    %208 = vmatpush1.bf16.msra.mxu0 0
    %209 = vmatprep.subr.bf16.mxu0 0
    %210 = vmatpush1.bf16.msra.mxu0 0
    %211 = vmatprep.subr.bf16.mxu0 0
    %212 = vmatpush1.bf16.msra.mxu0 0
    %213 = vmatprep.subr.bf16.mxu0 0
    %214 = vmatpush1.bf16.msra.mxu0 0
    %215 = vmatprep.subr.bf16.mxu0 %v199
    %216 = vmatpush1.bf16.msra.mxu0 %v196
    %217 = vmatprep.subr.bf16.mxu0 0
    %218 = vmatpush2.bf16.msra.mxu0 0
    %219 = vmatprep.subr.bf16.mxu0 0
    %220 = vmatpush2.bf16.msra.mxu0 0
    %221 = vmatprep.subr.bf16.mxu0 0
    %222 = vmatpush2.bf16.msra.mxu0 0
    %223 = vmatprep.subr.bf16.mxu0 0
    %224 = vmatpush2.bf16.msra.mxu0 0
    %225 = vmatprep.subr.bf16.mxu0 0
    %226 = vmatpush2.bf16.msra.mxu0 0
    %227 = vmatprep.subr.bf16.mxu0 0
    %228 = vmatpush2.bf16.msra.mxu0 0
    %229 = vmatprep.subr.bf16.mxu0 0
    %230 = vmatpush2.bf16.msra.mxu0 0
    %231 = vmatprep.subr.bf16.mxu0 0
    %232 = vmatpush2.bf16.msra.mxu0 0
    %233 = vmatprep.mubr.bf16.mxu0 0
    %234 = vmatmul.mubr.bf16.gmra.mxu0 %v183
    %v235 = vpop.f32.mrf.mxu0
    %v236 = vadd.f32 %v56, %v235
    %v237 = vpop.f32.mrf.mxu0
    %v238 = vadd.f32 %v56, %v237
    %v239 = vpop.f32.mrf.mxu0
    %v240 = vadd.f32 %v61, %v239
    %v241 = vpop.f32.mrf.mxu0
    %v242 = vadd.f32 %v61, %v241
    %243 = vmatprep.mubr.bf16.mxu0 0
    %244 = vmatmul.mubr.bf16.gmra.mxu0 %v186
    %v245 = vpop.f32.mrf.mxu0
    %v246 = vadd.f32 %v66, %v245
    %v247 = vpop.f32.mrf.mxu0
    %v248 = vadd.f32 %v66, %v247
    %v249 = vpop.f32.mrf.mxu0
    %v250 = vadd.f32 %v71, %v249
    %v251 = vpop.f32.mrf.mxu0
    %v252 = vadd.f32 %v71, %v251
    %253 = vmatprep.mubr.bf16.mxu0 0
    %254 = vmatmul.mubr.bf16.gmra.mxu0 %v189
    %v255 = vpop.f32.mrf.mxu0
    %v256 = vadd.f32 %v76, %v255
    %v257 = vpop.f32.mrf.mxu0
    %v258 = vadd.f32 %v76, %v257
    %v259 = vpop.f32.mrf.mxu0
    %v260 = vadd.f32 %v81, %v259
    %v261 = vpop.f32.mrf.mxu0
    %v262 = vadd.f32 %v81, %v261
    %263 = vmatprep.mubr.bf16.mxu0 0
    %264 = vmatmul.mubr.bf16.gmra.mxu0 %v192
    %v265 = vpop.f32.mrf.mxu0
    %v266 = vadd.f32 %v86, %v265
    %v267 = vpop.f32.mrf.mxu0
    %v268 = vadd.f32 %v86, %v267
    %v269 = vpop.f32.mrf.mxu0
    %v270 = vadd.f32 %v91, %v269
    %v271 = vpop.f32.mrf.mxu0
    %v272 = vadd.f32 %v91, %v271
    %273 = vdwg.mxu0
    %v274 = vmax.f32 %v236, 0.0
    %v275 = vmax.f32 %v238, 0.0
    %v276 = vmax.f32 %v240, 0.0
    %v277 = vmax.f32 %v242, 0.0
    %v278 = vmax.f32 %v246, 0.0
    %v279 = vmax.f32 %v248, 0.0
    %v280 = vmax.f32 %v250, 0.0
    %v281 = vmax.f32 %v252, 0.0
    %v282 = vmax.f32 %v256, 0.0
    %v283 = vmax.f32 %v258, 0.0
    %v284 = vmax.f32 %v260, 0.0
    %v285 = vmax.f32 %v262, 0.0
    %v286 = vmax.f32 %v266, 0.0
    %v287 = vmax.f32 %v268, 0.0
    %v288 = vmax.f32 %v270, 0.0
    %v289 = vmax.f32 %v272, 0.0
    %v290 = vpack.c.bf16 %v276, %v274
    %v291 = vpack.c.bf16 %v277, %v275
    %v292 = vpack.c.bf16 %v280, %v278
    %v293 = vpack.c.bf16 %v281, %v279
    %v294 = vpack.c.bf16 %v284, %v282
    %v295 = vpack.c.bf16 %v285, %v283
    %v296 = vpack.c.bf16 %v288, %v286
    %v297 = vpack.c.bf16 %v289, %v287
    %v306 = vunpack.c.l.b16 %v36
    %v307 = vunpack.c.l.b16 %v37
    %v308 = vunpack.c.l.b16 %v38
    %v309 = vunpack.c.l.b16 %v39
    %v310 = vunpack.c.l.b16 %v40
    %v311 = vunpack.c.l.b16 %v41
    %v312 = vunpack.c.l.b16 %v42
    %v313 = vunpack.c.l.b16 %v43
    %v314 = vpack.c.b16 %v307, %v306
    %v315 = vpack.c.b16 %v309, %v308
    %v316 = vpack.c.b16 %v311, %v310
    %v317 = vpack.c.b16 %v313, %v312
    %vm318 = vcmask 523264
    %v320 = vsel %vm318, %v314, 0
    %v323 = vsel %vm318, %v315, 0
    %v326 = vsel %vm318, %v316, 0
    %v329 = vsel %vm318, %v317, 0
    %331 = vmatprep.subr.bf16.mxu0 0
    %332 = vmatpush1.bf16.msra.mxu0 0
    %333 = vmatprep.subr.bf16.mxu0 0
    %334 = vmatpush1.bf16.msra.mxu0 0
    %335 = vmatprep.subr.bf16.mxu0 0
    %336 = vmatpush1.bf16.msra.mxu0 0
    %337 = vmatprep.subr.bf16.mxu0 0
    %338 = vmatpush1.bf16.msra.mxu0 0
    %339 = vmatprep.subr.bf16.mxu0 %v297
    %340 = vmatpush1.bf16.msra.mxu0 %v296
    %341 = vmatprep.subr.bf16.mxu0 %v295
    %342 = vmatpush1.bf16.msra.mxu0 %v294
    %343 = vmatprep.subr.bf16.mxu0 %v293
    %344 = vmatpush1.bf16.msra.mxu0 %v292
    %345 = vmatprep.subr.bf16.mxu0 %v291
    %346 = vmatpush1.bf16.msra.mxu0 %v290
    %347 = vmatprep.subr.bf16.mxu0 0
    %348 = vmatpush2.bf16.msra.mxu0 0
    %349 = vmatprep.subr.bf16.mxu0 0
    %350 = vmatpush2.bf16.msra.mxu0 0
    %351 = vmatprep.subr.bf16.mxu0 0
    %352 = vmatpush2.bf16.msra.mxu0 0
    %353 = vmatprep.subr.bf16.mxu0 0
    %354 = vmatpush2.bf16.msra.mxu0 0
    %355 = vmatprep.subr.bf16.mxu0 0
    %356 = vmatpush2.bf16.msra.mxu0 0
    %357 = vmatprep.subr.bf16.mxu0 0
    %358 = vmatpush2.bf16.msra.mxu0 0
    %359 = vmatprep.subr.bf16.mxu0 0
    %360 = vmatpush2.bf16.msra.mxu0 0
    %361 = vmatprep.subr.bf16.mxu0 0
    %362 = vmatpush2.bf16.msra.mxu0 0
    %363 = vmatprep.mubr.bf16.mxu0 0
    %364 = vmatmul.mubr.bf16.gmra.mxu0 %v320
    %v365 = vpop.f32.mrf.mxu0
    %v366 = vadd.f32 %v104, %v365
    %v367 = vpop.f32.mrf.mxu0
    %v368 = vadd.f32 %v104, %v367
    %v369 = vpop.f32.mrf.mxu0
    %v370 = vadd.f32 %v109, %v369
    %v371 = vpop.f32.mrf.mxu0
    %v372 = vadd.f32 %v109, %v371
    %373 = vmatprep.mubr.bf16.mxu0 0
    %374 = vmatmul.mubr.bf16.gmra.mxu0 %v323
    %v375 = vpop.f32.mrf.mxu0
    %v376 = vadd.f32 %v114, %v375
    %v377 = vpop.f32.mrf.mxu0
    %v378 = vadd.f32 %v114, %v377
    %v379 = vpop.f32.mrf.mxu0
    %v380 = vadd.f32 %v119, %v379
    %v381 = vpop.f32.mrf.mxu0
    %v382 = vadd.f32 %v119, %v381
    %383 = vmatprep.mubr.bf16.mxu0 0
    %384 = vmatmul.mubr.bf16.gmra.mxu0 %v326
    %v385 = vpop.f32.mrf.mxu0
    %v386 = vadd.f32 %v124, %v385
    %v387 = vpop.f32.mrf.mxu0
    %v388 = vadd.f32 %v124, %v387
    %v389 = vpop.f32.mrf.mxu0
    %v390 = vadd.f32 %v129, %v389
    %v391 = vpop.f32.mrf.mxu0
    %v392 = vadd.f32 %v129, %v391
    %393 = vmatprep.mubr.bf16.mxu0 0
    %394 = vmatmul.mubr.bf16.gmra.mxu0 %v329
    %v395 = vpop.f32.mrf.mxu0
    %v396 = vadd.f32 %v134, %v395
    %v397 = vpop.f32.mrf.mxu0
    %v398 = vadd.f32 %v134, %v397
    %v399 = vpop.f32.mrf.mxu0
    %v400 = vadd.f32 %v139, %v399
    %v401 = vpop.f32.mrf.mxu0
    %v402 = vadd.f32 %v139, %v401
    %403 = vdwg.mxu0
    %v404 = vmax.f32 %v366, 0.0
    %v405 = vmax.f32 %v368, 0.0
    %v406 = vmax.f32 %v370, 0.0
    %v407 = vmax.f32 %v372, 0.0
    %v408 = vmax.f32 %v376, 0.0
    %v409 = vmax.f32 %v378, 0.0
    %v410 = vmax.f32 %v380, 0.0
    %v411 = vmax.f32 %v382, 0.0
    %v412 = vmax.f32 %v386, 0.0
    %v413 = vmax.f32 %v388, 0.0
    %v414 = vmax.f32 %v390, 0.0
    %v415 = vmax.f32 %v392, 0.0
    %v416 = vmax.f32 %v396, 0.0
    %v417 = vmax.f32 %v398, 0.0
    %v418 = vmax.f32 %v400, 0.0
    %v419 = vmax.f32 %v402, 0.0
    %v420 = vpack.c.bf16 %v406, %v404
    %v421 = vpack.c.bf16 %v407, %v405
    %v422 = vpack.c.bf16 %v410, %v408
    %v423 = vpack.c.bf16 %v411, %v409
    %v424 = vpack.c.bf16 %v414, %v412
    %v425 = vpack.c.bf16 %v415, %v413
    %v426 = vpack.c.bf16 %v418, %v416
    %v427 = vpack.c.bf16 %v419, %v417
    %v429 = vsel %vm318, %v44, 0
    %431 = vmatprep.subr.bf16.mxu0 0
    %432 = vmatpush1.bf16.msra.mxu0 0
    %433 = vmatprep.subr.bf16.mxu0 0
    %434 = vmatpush1.bf16.msra.mxu0 0
    %435 = vmatprep.subr.bf16.mxu0 0
    %436 = vmatpush1.bf16.msra.mxu0 0
    %437 = vmatprep.subr.bf16.mxu0 0
    %438 = vmatpush1.bf16.msra.mxu0 0
    %439 = vmatprep.subr.bf16.mxu0 %v427
    %440 = vmatpush1.bf16.msra.mxu0 %v426
    %441 = vmatprep.subr.bf16.mxu0 %v425
    %442 = vmatpush1.bf16.msra.mxu0 %v424
    %443 = vmatprep.subr.bf16.mxu0 %v423
    %444 = vmatpush1.bf16.msra.mxu0 %v422
    %445 = vmatprep.subr.bf16.mxu0 %v421
    %446 = vmatpush1.bf16.msra.mxu0 %v420
    %447 = vmatprep.subr.bf16.mxu0 0
    %448 = vmatpush2.bf16.msra.mxu0 0
    %449 = vmatprep.subr.bf16.mxu0 0
    %450 = vmatpush2.bf16.msra.mxu0 0
    %451 = vmatprep.subr.bf16.mxu0 0
    %452 = vmatpush2.bf16.msra.mxu0 0
    %453 = vmatprep.subr.bf16.mxu0 0
    %454 = vmatpush2.bf16.msra.mxu0 0
    %455 = vmatprep.subr.bf16.mxu0 0
    %456 = vmatpush2.bf16.msra.mxu0 0
    %457 = vmatprep.subr.bf16.mxu0 0
    %458 = vmatpush2.bf16.msra.mxu0 0
    %459 = vmatprep.subr.bf16.mxu0 0
    %460 = vmatpush2.bf16.msra.mxu0 0
    %461 = vmatprep.subr.bf16.mxu0 0
    %462 = vmatpush2.bf16.msra.mxu0 0
    %463 = vmatprep.mubr.bf16.mxu0 0
    %464 = vmatmul.mubr.bf16.gmra.mxu0 %v429
    %v465 = vpop.f32.mrf.mxu0
    %v466 = vadd.f32 %v145, %v465
    %v467 = vpop.f32.mrf.mxu0
    %v468 = vadd.f32 %v145, %v467
    %v469 = vpop.f32.mrf.mxu0
    %v470 = vpop.f32.mrf.mxu0
    %471 = vdwg.mxu0
    %v474 = vcombine.low %v466, %v468
    %v476 = vunpack.c.l.s4 1983009808
    %v477 = vunpack.c.0.s8 %v476
    %v478 = vlaneseq
    %v479 = vshrl.u32 %v478, 7
    %v480 = vsub.s32 %v477, %v479
    %v481 = vrot.slane %v474, %v480
    %483 = vst [vmem:[#allocation2] sm:$0xf] %v481
    // Predicated region
    $region30: #{scorenet_forward_fm.1} parent=1 // pred_check
      _
    $region31: #{scorenet_forward_fm.1} parent=1 // pred_check_branch
      %485 = sbr.rel (0) target = $region33
    $region32: #{scorenet_forward_fm.1} parent=1 // pred_region
      %s487 = ssub.s32 64, 64
      %488 = vsyncadd [#allocation3], %s487
      %s490 = sshll.u32 [#allocation2], 4
      %s491 = int_to_ptr.vmem [resolvable:$true] %s490
      %493 = dma.vmem_to_hbm [thread:$0]  %s491, 64, %s7, [#allocation3]
    $region33: #{scorenet_forward_fm.1} parent=1 // pred_fallthru
      _
    // Predicated region
    $region34: #{scorenet_forward_fm.1} parent=1 // pred_check
      _
    $region35: #{scorenet_forward_fm.1} parent=1 // pred_check_branch
      %495 = sbr.rel (0) target = $region37
    $region36: #{scorenet_forward_fm.1} parent=1 // pred_region
      %496 = dma.done [#allocation3], 64
    $region37: #{scorenet_forward_fm.1} parent=1 // pred_fallthru
      _
    %497 = vsyncpa [#allocation3], 1

</llo_original>
